<compile_context>
chip_gen: v7x
topology: tpu7x:2x2x1
jax: 0.10.0
libtpu: 0.0.40
codegen_flags: <defaults>
</compile_context>

<pallas_src>
import functools

import jax
import jax.numpy as jnp
from jax.experimental import pallas as pl
from jax.experimental.pallas import tpu as pltpu

_LANE = 128       # lane width (last dim)
_SUBLANE = 8      # sublane width (second-to-last dim)
_MXU_WIDE = 256   # v6e/v7x MXU width
_MAX_TM = 512     # max batch-tile (sublanes) per grid step


def _round_up(n, m):
    return ((n + m - 1) // m) * m


def _padded_feature_dim(dim_layers):
    """Common padded feature dim for all layers (stacked weights are square)."""
    d = max(dim_layers)
    dp = _round_up(d, _LANE)
    if dp > _LANE:
        # Once hidden dims exceed 128, align to the 256-wide v6e/v7x MXU.
        dp = _round_up(dp, _MXU_WIDE)
    return dp


# ----------------------------------------------------------------------------
# Fused MLP kernel: all layers in a single kernel invocation.
# Args: alpha (SMEM scalar), x tile, stacked weights, stacked biases, out tile.
# ----------------------------------------------------------------------------
def _make_fused_mlp_kernel(n_layers):
    def kernel(alpha_ref, x_ref, w_ref, b_ref, o_ref):
        a = alpha_ref[0]                                # shared PReLU slope
        h = x_ref[...]                                  # (TM, Dp) f32
        for i in range(n_layers):                       # static unroll
            w = w_ref[i]                                # (Dp, Dp) bf16, VMEM-resident
            b = b_ref[i]                                # (1, Dp)  f32
            h = jnp.dot(h.astype(jnp.bfloat16), w,
                        preferred_element_type=jnp.float32) + b
            if i < n_layers - 1:                        # shared PReLU between layers
                h = jnp.where(h > 0, h, a * h)
        o_ref[...] = h.astype(o_ref.dtype)

    return kernel


# ----------------------------------------------------------------------------
# Parameter handling
# ----------------------------------------------------------------------------
def init_params(dim_layers, key):
    """Deterministic init matching torch.nn.Linear shapes.

    torch weight is (out, in); we store the transpose (in, out) so the kernel
    computes x @ W + b. PReLU default init is 0.25 (single shared parameter).
    """
    params = []
    for i in range(len(dim_layers) - 1):
        fan_in, fan_out = dim_layers[i], dim_layers[i + 1]
        key, kw, kb = jax.random.split(key, 3)
        bound = 1.0 / jnp.sqrt(fan_in)
        w = jax.random.uniform(kw, (fan_in, fan_out), jnp.float32, -bound, bound)
        b = jax.random.uniform(kb, (fan_out,), jnp.float32, -bound, bound)
        params.append((w, b))
    alpha = jnp.float32(0.25)
    return params, alpha


def pack_params(params, dim_layers):
    """Stack + zero-pad all layers to one (L, Dp, Dp) bf16 weight array and
    one (L, 1, Dp) f32 bias array (done once, outside the hot path)."""
    Dp = _padded_feature_dim(dim_layers)
    L = len(params)
    w_stack = jnp.zeros((L, Dp, Dp), jnp.float32)
    b_stack = jnp.zeros((L, 1, Dp), jnp.float32)
    for i, (w, b) in enumerate(params):
        kin, kout = w.shape
        w_stack = w_stack.at[i, :kin, :kout].set(w)
        b_stack = b_stack.at[i, 0, :kout].set(b)
    return w_stack.astype(jnp.bfloat16), b_stack, Dp


def pad_input(x, Dp):
    """Pad x once (outside the hot path) to a lane-dense, sublane-aligned tile."""
    M, K = x.shape
    tm = min(_round_up(M, _SUBLANE), _MAX_TM)
    Mp = _round_up(M, tm)
    xp = jnp.zeros((Mp, Dp), jnp.float32).at[:M, :K].set(x)
    return xp, tm


# ----------------------------------------------------------------------------
# Forward pass: one fused pallas_call, batch-tiled grid
# ----------------------------------------------------------------------------
@functools.partial(jax.jit, static_argnames=("tm",))
def fused_mlp_forward(xp, w_stack, b_stack, alpha, *, tm):
    Mp, Dp = xp.shape
    L = w_stack.shape[0]
    grid_m = Mp // tm

    alpha_smem = jnp.asarray(alpha, jnp.float32).reshape(1)

    # Advisory cost hint so XLA can overlap surrounding HLO with this call.
    flops = 2 * Mp * L * Dp * Dp
    bytes_accessed = (xp.size * 4 + w_stack.size * 2 + b_stack.size * 4
                      + Mp * Dp * 4)

    # Scoped-VMEM budget: stacked params + double-buffered x/out tiles + live
    # activations, with headroom; capped at v7x's 64 MiB physical VMEM.
    vmem_needed = (w_stack.size * 2 + b_stack.size * 4
                   + 2 * 2 * (tm * Dp * 4)        # double-buffered x & out tiles
                   + 2 * (tm * Dp * 4))           # live f32 activations
    vmem_limit = int(min(64 * 1024 * 1024, max(32 * 1024 * 1024, 2 * vmem_needed)))

    return pl.pallas_call(
        _make_fused_mlp_kernel(L),
        out_shape=jax.ShapeDtypeStruct((Mp, Dp), jnp.float32),
        grid=(grid_m,),
        in_specs=[
            pl.BlockSpec(memory_space=pltpu.MemorySpace.SMEM),     # alpha (scalar)
            pl.BlockSpec((tm, Dp), lambda i: (i, 0)),              # x batch-tile
            pl.BlockSpec((L, Dp, Dp), lambda i: (0, 0, 0)),        # stacked weights
            pl.BlockSpec((L, 1, Dp), lambda i: (0, 0, 0)),         # stacked biases
        ],
        out_specs=pl.BlockSpec((tm, Dp), lambda i: (i, 0)),
        compiler_params=pltpu.CompilerParams(
            dimension_semantics=("parallel",),                     # 2 TCs on v7x
            vmem_limit_bytes=vmem_limit),
        cost_estimate=pl.CostEstimate(
            flops=flops, transcendentals=0, bytes_accessed=bytes_accessed),
    )(alpha_smem, xp, w_stack, b_stack)


# ----------------------------------------------------------------------------
# Pure-JAX reference (unpadded) for correctness checking
# ----------------------------------------------------------------------------
def reference_forward(x, params, alpha):
    out = x
    n_layers = len(params)
    for i, (w, b) in enumerate(params):
        out = out @ w + b
        if i < n_layers - 1:
            out = jnp.where(out > 0, out, alpha * out)
    return out


if __name__ == "__main__":
    dim_layers = [32, 64, 48, 16]   # 3 Linear layers, shared PReLU after first 2
    batch = 8

    key = jax.random.PRNGKey(0)
    key, kx = jax.random.split(key)
    x = jax.random.normal(kx, (batch, dim_layers[0]), jnp.float32)

    params, alpha = init_params(dim_layers, key)

    # One-time preparation (outside the hot path): pack/pad params, pad input.
    w_stack, b_stack, Dp = pack_params(params, dim_layers)
    xp, tm = pad_input(x, Dp)

    out_padded = fused_mlp_forward(xp, w_stack, b_stack, alpha, tm=tm)
    out_padded = jax.block_until_ready(out_padded)
    # Callers that can consume 128-lane output should use out_padded directly;
    # we slice only for the correctness check here.
    out = out_padded[:batch, :dim_layers[-1]]

    # Reference uses bf16-rounded weights (kernel computes bf16 x bf16 -> f32).
    ref_params = [(w.astype(jnp.bfloat16).astype(jnp.float32), b)
                  for w, b in params]
    ref = reference_forward(x, ref_params, alpha)

    assert out.shape == (batch, dim_layers[-1])
    assert jnp.allclose(out, ref, atol=2e-2, rtol=2e-2)

    print("KERNEL_OK")
</pallas_src>

<mosaic_0001>
module attributes {stable_mosaic.version = 11 : i64} {
  func.func @kernel(%arg0: i32, %arg1: memref<1xf32, #tpu.memory_space<smem>>, %arg2: memref<8x128xf32, #tpu.memory_space<vmem>>, %arg3: memref<3x128x128xbf16, #tpu.memory_space<vmem>>, %arg4: memref<3x1x128xf32, #tpu.memory_space<vmem>>, %arg5: memref<8x128xf32, #tpu.memory_space<vmem>>) attributes {dimension_semantics = [#tpu.dimension_semantics<parallel>], iteration_bounds = array<i64: 1>, scalar_prefetch = 0 : i64, scratch_operands = 0 : i64, tpu.core_type = #tpu.core_type<tc>, window_params = [{transform_indices = @transform_0, window_bounds = array<i64: 1>}, {transform_indices = @transform_1, window_bounds = array<i64: 8, 128>}, {pipeline_mode = #tpu.pipeline_mode<synchronous>, transform_indices = @transform_2, window_bounds = array<i64: 3, 128, 128>}, {pipeline_mode = #tpu.pipeline_mode<synchronous>, transform_indices = @transform_3, window_bounds = array<i64: 3, 1, 128>}, {transform_indices = @transform_4, window_bounds = array<i64: 8, 128>}]} {
    %c0 = arith.constant 0 : index
    %0 = memref.load %arg1[%c0] : memref<1xf32, #tpu.memory_space<smem>>
    %c0_0 = arith.constant 0 : index
    %c0_1 = arith.constant 0 : index
    %1 = vector.load %arg2[%c0_0, %c0_1] : memref<8x128xf32, #tpu.memory_space<vmem>>, vector<8x128xf32>
    %c0_2 = arith.constant 0 : index
    %c0_3 = arith.constant 0 : index
    %c0_4 = arith.constant 0 : index
    %2 = vector.load %arg3[%c0_2, %c0_3, %c0_4] : memref<3x128x128xbf16, #tpu.memory_space<vmem>>, vector<1x128x128xbf16>
    %3 = vector.shape_cast %2 : vector<1x128x128xbf16> to vector<128x128xbf16>
    %c0_5 = arith.constant 0 : index
    %c0_6 = arith.constant 0 : index
    %c0_7 = arith.constant 0 : index
    %4 = vector.load %arg4[%c0_5, %c0_6, %c0_7] : memref<3x1x128xf32, #tpu.memory_space<vmem>>, vector<1x1x128xf32>
    %5 = vector.shape_cast %4 : vector<1x1x128xf32> to vector<1x128xf32>
    %6 = arith.truncf %1 : vector<8x128xf32> to vector<8x128xbf16>
    %cst = arith.constant dense<0.000000e+00> : vector<8x128xf32>
    %7 = tpu.matmul %6, %3, %cst {dimension_numbers = #tpu.dot_dimension_numbers<[1], [0], [0], [1], [0, 0, 1, 1], [], []>} : vector<8x128xbf16>, vector<128x128xbf16>, vector<8x128xf32> -> vector<8x128xf32>
    %8 = vector.broadcast %5 : vector<1x128xf32> to vector<8x128xf32>
    %9 = arith.addf %7, %8 : vector<8x128xf32>
    %cst_8 = arith.constant 0.000000e+00 : f32
    %10 = vector.broadcast %cst_8 : f32 to vector<8x128xf32>
    %11 = arith.cmpf ogt, %9, %10 : vector<8x128xf32>
    %12 = vector.broadcast %0 : f32 to vector<8x128xf32>
    %13 = arith.mulf %12, %9 : vector<8x128xf32>
    %14 = arith.select %11, %9, %13 : vector<8x128xi1>, vector<8x128xf32>
    %c1 = arith.constant 1 : index
    %c0_9 = arith.constant 0 : index
    %c0_10 = arith.constant 0 : index
    %15 = vector.load %arg3[%c1, %c0_9, %c0_10] : memref<3x128x128xbf16, #tpu.memory_space<vmem>>, vector<1x128x128xbf16>
    %16 = vector.shape_cast %15 : vector<1x128x128xbf16> to vector<128x128xbf16>
    %c1_11 = arith.constant 1 : index
    %c0_12 = arith.constant 0 : index
    %c0_13 = arith.constant 0 : index
    %17 = vector.load %arg4[%c1_11, %c0_12, %c0_13] : memref<3x1x128xf32, #tpu.memory_space<vmem>>, vector<1x1x128xf32>
    %18 = vector.shape_cast %17 : vector<1x1x128xf32> to vector<1x128xf32>
    %19 = arith.truncf %14 : vector<8x128xf32> to vector<8x128xbf16>
    %cst_14 = arith.constant dense<0.000000e+00> : vector<8x128xf32>
    %20 = tpu.matmul %19, %16, %cst_14 {dimension_numbers = #tpu.dot_dimension_numbers<[1], [0], [0], [1], [0, 0, 1, 1], [], []>} : vector<8x128xbf16>, vector<128x128xbf16>, vector<8x128xf32> -> vector<8x128xf32>
    %21 = vector.broadcast %18 : vector<1x128xf32> to vector<8x128xf32>
    %22 = arith.addf %20, %21 : vector<8x128xf32>
    %cst_15 = arith.constant 0.000000e+00 : f32
    %23 = vector.broadcast %cst_15 : f32 to vector<8x128xf32>
    %24 = arith.cmpf ogt, %22, %23 : vector<8x128xf32>
    %25 = vector.broadcast %0 : f32 to vector<8x128xf32>
    %26 = arith.mulf %25, %22 : vector<8x128xf32>
    %27 = arith.select %24, %22, %26 : vector<8x128xi1>, vector<8x128xf32>
    %c2 = arith.constant 2 : index
    %c0_16 = arith.constant 0 : index
    %c0_17 = arith.constant 0 : index
    %28 = vector.load %arg3[%c2, %c0_16, %c0_17] : memref<3x128x128xbf16, #tpu.memory_space<vmem>>, vector<1x128x128xbf16>
    %29 = vector.shape_cast %28 : vector<1x128x128xbf16> to vector<128x128xbf16>
    %c2_18 = arith.constant 2 : index
    %c0_19 = arith.constant 0 : index
    %c0_20 = arith.constant 0 : index
    %30 = vector.load %arg4[%c2_18, %c0_19, %c0_20] : memref<3x1x128xf32, #tpu.memory_space<vmem>>, vector<1x1x128xf32>
    %31 = vector.shape_cast %30 : vector<1x1x128xf32> to vector<1x128xf32>
    %32 = arith.truncf %27 : vector<8x128xf32> to vector<8x128xbf16>
    %cst_21 = arith.constant dense<0.000000e+00> : vector<8x128xf32>
    %33 = tpu.matmul %32, %29, %cst_21 {dimension_numbers = #tpu.dot_dimension_numbers<[1], [0], [0], [1], [0, 0, 1, 1], [], []>} : vector<8x128xbf16>, vector<128x128xbf16>, vector<8x128xf32> -> vector<8x128xf32>
    %34 = vector.broadcast %31 : vector<1x128xf32> to vector<8x128xf32>
    %35 = arith.addf %33, %34 : vector<8x128xf32>
    %c0_22 = arith.constant 0 : index
    %c0_23 = arith.constant 0 : index
    %36 = vector.load %arg5[%c0_22, %c0_23] : memref<8x128xf32, #tpu.memory_space<vmem>>, vector<8x128xf32>
    tpu.vector_store %arg5[%c0_22, %c0_23], %35 {strides = array<i32>} : memref<8x128xf32, #tpu.memory_space<vmem>>, vector<8x128xf32>,
    return
  }
  func.func @transform_0(%arg0: i32) -> i32 {
    %c0_i32 = arith.constant 0 : i32
    %c0_i32_0 = arith.constant 0 : i32
    return %c0_i32 : i32
  }
  func.func @transform_1(%arg0: i32) -> (i32, i32) {
    %c0_i32 = arith.constant 0 : i32
    %c0_i32_0 = arith.constant 0 : i32
    return %arg0, %c0_i32 : i32, i32
  }
  func.func @transform_2(%arg0: i32) -> (i32, i32, i32) {
    %c0_i32 = arith.constant 0 : i32
    %c0_i32_0 = arith.constant 0 : i32
    %c0_i32_1 = arith.constant 0 : i32
    %c0_i32_2 = arith.constant 0 : i32
    return %c0_i32, %c0_i32_0, %c0_i32_1 : i32, i32, i32
  }
  func.func @transform_3(%arg0: i32) -> (i32, i32, i32) {
    %c0_i32 = arith.constant 0 : i32
    %c0_i32_0 = arith.constant 0 : i32
    %c0_i32_1 = arith.constant 0 : i32
    %c0_i32_2 = arith.constant 0 : i32
    return %c0_i32, %c0_i32_0, %c0_i32_1 : i32, i32, i32
  }
  func.func @transform_4(%arg0: i32) -> (i32, i32) {
    %c0_i32 = arith.constant 0 : i32
    %c0_i32_0 = arith.constant 0 : i32
    return %arg0, %c0_i32 : i32, i32
  }
}

</mosaic_0001>

<llo_original>
// kernel: fused_mlp_forward.1
$region0: #{fused_mlp_forward.1}
  #allocation0 [shape = 'u32[]', space=smem, size = 0x4, offset = 0x4, fixed_abs, tag = 'smem constant byte address 0x4 - core index']
  #allocation1 [shape = 'u32[144,128]{1,0:T(1,128)}', space=vmem, size = 0x12000, scoped, tag = 'internal scratch']
  #allocation2 [shape = 'f32[1]{0:T(128)S(6)}', space=smem, size = 0x200, scoped, tag = 'scoped memory for fused_mlp_forward.1']
  %s0 = inlined_call_operand.<no memory space> [shape: f32[1], index: 0, kind: input, shape index: {}]
  %s1 = inlined_call_operand.hbm [shape: f32[8,128], index: 1, kind: input, shape index: {}]
  %s2 = inlined_call_operand.hbm [shape: bf16[3,128,128], index: 2, kind: input, shape index: {}]
  %s3 = inlined_call_operand.vmem [shape: f32[3,1,128], index: 3, kind: input, shape index: {}]
  %s4 = inlined_call_operand.hbm [shape: f32[8,128], index: 4, kind: output, shape index: {}]
  %s5 = sld [smem:[#allocation0]]
  $region34: #{fused_mlp_forward.1} parent=0
    _
  %s7 = ssub.s32 1, %s5
  %s8 = scalar_select 0, %s7, %s5
  %9 = sst [smem:[#allocation2]] %s0
  $region1: #{fused_mlp_forward.1} parent=0
    #allocation3 [shape = 'u8[4096]{0}', space=vmem, size = 0x1000, scoped, tag = 'input window, operand 1, single buffered']
    #allocation4 [shape = 's32[1]{0}', space=sflag, size = 0x4, scoped, tag = 'scoped memory for fused_mlp_forward.1']
    #allocation5 [shape = 's32[1]{0}', space=sflag, size = 0x4, scoped, tag = 'scoped memory for fused_mlp_forward.1']
    #allocation6 [shape = 'u8[98304]{0}', space=vmem, size = 0x18000, scoped, tag = 'input window, operand 2, single buffered']
    #allocation7 [shape = 's32[1]{0}', space=sflag, size = 0x4, scoped, tag = 'scoped memory for fused_mlp_forward.1']
    #allocation8 [shape = 'u8[4096]{0}', space=vmem, size = 0x1000, scoped, tag = 'output window, operand 0, single buffered']
    %10 = vsyncpa [#allocation4], 0
    %11 = vsyncpa [#allocation7], 0
    %12 = vsyncpa [#allocation5], 0
    // Predicated region
    $region2: #{fused_mlp_forward.1} parent=1 // pred_check
      _
    $region3: #{fused_mlp_forward.1} parent=1 // pred_check_branch
      %14 = sbr.rel (0) target = $region5
    $region4: #{fused_mlp_forward.1} parent=1 // pred_region
      _
    $region5: #{fused_mlp_forward.1} parent=1 // pred_fallthru
      _
    // Predicated region
    $region6: #{fused_mlp_forward.1} parent=1 // pred_check
      _
    $region7: #{fused_mlp_forward.1} parent=1 // pred_check_branch
      %16 = sbr.rel (0) target = $region9
    $region8: #{fused_mlp_forward.1} parent=1 // pred_region
      %s18 = ssub.s32 128, 128
      %19 = vsyncadd [#allocation4], %s18
      %s21 = sshll.u32 [#allocation3], 4
      %s22 = int_to_ptr.vmem [resolvable:$true] %s21
      %24 = dma.hbm_to_vmem [thread:$0]  %s1, 128, %s22, [#allocation4]
    $region9: #{fused_mlp_forward.1} parent=1 // pred_fallthru
      _
    // Predicated region
    $region10: #{fused_mlp_forward.1} parent=1 // pred_check
      _
    $region11: #{fused_mlp_forward.1} parent=1 // pred_check_branch
      %26 = sbr.rel (0) target = $region13
    $region12: #{fused_mlp_forward.1} parent=1 // pred_region
      %s28 = ssub.s32 3072, 3072
      %29 = vsyncadd [#allocation7], %s28
      %s30 = sshll.u32 [#allocation6], 4
      %s31 = int_to_ptr.vmem [resolvable:$true] %s30
      %36 = dma.hbm_to_vmem [thread:$0]  %s2, 3072, %s31, [#allocation7], 64, 64, 4
    $region13: #{fused_mlp_forward.1} parent=1 // pred_fallthru
      _
    // Predicated region
    $region14: #{fused_mlp_forward.1} parent=1 // pred_check
      _
    $region15: #{fused_mlp_forward.1} parent=1 // pred_check_branch
      %38 = sbr.rel (0) target = $region17
    $region16: #{fused_mlp_forward.1} parent=1 // pred_region
      _
    $region17: #{fused_mlp_forward.1} parent=1 // pred_fallthru
      _
    // Predicated region
    $region18: #{fused_mlp_forward.1} parent=1 // pred_check
      _
    $region19: #{fused_mlp_forward.1} parent=1 // pred_check_branch
      %40 = sbr.rel (0) target = $region21
    $region20: #{fused_mlp_forward.1} parent=1 // pred_region
      %41 = dma.done [#allocation4], 128
    $region21: #{fused_mlp_forward.1} parent=1 // pred_fallthru
      _
    // Predicated region
    $region22: #{fused_mlp_forward.1} parent=1 // pred_check
      _
    $region23: #{fused_mlp_forward.1} parent=1 // pred_check_branch
      %43 = sbr.rel (0) target = $region25
    $region24: #{fused_mlp_forward.1} parent=1 // pred_region
      %44 = dma.done [#allocation7], 3072
    $region25: #{fused_mlp_forward.1} parent=1 // pred_fallthru
      _
    %s46 = sld [smem:[#allocation2]]
    %v47 = vld [vmem:[#allocation3] sm:$0xff]
    %v48 = vld [vmem:[#allocation6] sm:$0xf]
    %v49 = vld [vmem:[#allocation6 + $0x4] sm:$0xf]
    %v50 = vld [vmem:[#allocation6 + $0x8] sm:$0xf]
    %v51 = vld [vmem:[#allocation6 + $0xc] sm:$0xf]
    %v52 = vld [vmem:[#allocation6 + $0x10] sm:$0xf]
    %v53 = vld [vmem:[#allocation6 + $0x14] sm:$0xf]
    %v54 = vld [vmem:[#allocation6 + $0x18] sm:$0xf]
    %v55 = vld [vmem:[#allocation6 + $0x1c] sm:$0xf]
    %v56 = vld [vmem:[#allocation6 + $0x20] sm:$0xf]
    %v57 = vld [vmem:[#allocation6 + $0x24] sm:$0xf]
    %v58 = vld [vmem:[#allocation6 + $0x28] sm:$0xf]
    %v59 = vld [vmem:[#allocation6 + $0x2c] sm:$0xf]
    %v60 = vld [vmem:[#allocation6 + $0x30] sm:$0xf]
    %v61 = vld [vmem:[#allocation6 + $0x34] sm:$0xf]
    %v62 = vld [vmem:[#allocation6 + $0x38] sm:$0xf]
    %v63 = vld [vmem:[#allocation6 + $0x3c] sm:$0xf]
    %v64 = vld [vmem:[%s3] sm:$0x1]
    %v65 = vpack.c.bf16 %v47, %v47
    %v67 = vlaneseq
    %v68 = vshrl.u32 %v67, 7
    %v69 = vsub.s32 0, %v68
    %v70 = vrot.slane %v64, %v69
    %v88 = vunpack.c.l.b16 %v48
    %v89 = vunpack.c.l.b16 %v49
    %v90 = vunpack.c.l.b16 %v50
    %v91 = vunpack.c.l.b16 %v51
    %v92 = vunpack.c.l.b16 %v52
    %v93 = vunpack.c.l.b16 %v53
    %v94 = vunpack.c.l.b16 %v54
    %v95 = vunpack.c.l.b16 %v55
    %v96 = vunpack.c.l.b16 %v56
    %v97 = vunpack.c.l.b16 %v57
    %v98 = vunpack.c.l.b16 %v58
    %v99 = vunpack.c.l.b16 %v59
    %v100 = vunpack.c.l.b16 %v60
    %v101 = vunpack.c.l.b16 %v61
    %v102 = vunpack.c.l.b16 %v62
    %v103 = vunpack.c.l.b16 %v63
    %v104 = vpack.c.b16 %v89, %v88
    %v105 = vpack.c.b16 %v91, %v90
    %v106 = vpack.c.b16 %v93, %v92
    %v107 = vpack.c.b16 %v95, %v94
    %v108 = vpack.c.b16 %v97, %v96
    %v109 = vpack.c.b16 %v99, %v98
    %v110 = vpack.c.b16 %v101, %v100
    %v111 = vpack.c.b16 %v103, %v102
    %120 = vmatprep.subr.bf16.mxu0 0
    %121 = vmatpush1.bf16.msra.mxu0 %v104
    %122 = vmatprep.subr.bf16.mxu0 0
    %123 = vmatpush1.bf16.msra.mxu0 %v105
    %124 = vmatprep.subr.bf16.mxu0 0
    %125 = vmatpush1.bf16.msra.mxu0 %v106
    %126 = vmatprep.subr.bf16.mxu0 0
    %127 = vmatpush1.bf16.msra.mxu0 %v107
    %128 = vmatprep.subr.bf16.mxu0 0
    %129 = vmatpush1.bf16.msra.mxu0 %v108
    %130 = vmatprep.subr.bf16.mxu0 0
    %131 = vmatpush1.bf16.msra.mxu0 %v109
    %132 = vmatprep.subr.bf16.mxu0 0
    %133 = vmatpush1.bf16.msra.mxu0 %v110
    %134 = vmatprep.subr.bf16.mxu0 0
    %135 = vmatpush1.bf16.msra.mxu0 %v111
    %136 = vmatprep.subr.bf16.mxu0 0
    %137 = vmatpush1.bf16.msra.mxu0 0
    %138 = vmatprep.subr.bf16.mxu0 0
    %139 = vmatpush1.bf16.msra.mxu0 0
    %140 = vmatprep.subr.bf16.mxu0 0
    %141 = vmatpush1.bf16.msra.mxu0 0
    %142 = vmatprep.subr.bf16.mxu0 0
    %143 = vmatpush1.bf16.msra.mxu0 0
    %144 = vmatprep.subr.bf16.mxu0 0
    %145 = vmatpush1.bf16.msra.mxu0 0
    %146 = vmatprep.subr.bf16.mxu0 0
    %147 = vmatpush1.bf16.msra.mxu0 0
    %148 = vmatprep.subr.bf16.mxu0 0
    %149 = vmatpush1.bf16.msra.mxu0 0
    %150 = vmatprep.subr.bf16.mxu0 0
    %151 = vmatpush1.bf16.msra.mxu0 0
    %152 = vmatprep.mubr.bf16.mxu0 0
    %153 = vmatmul.mubr.bf16.gmra.mrb[0].mxu0 %v65
    %v154 = vpop.f32.mrb[0].mxu0
    %v155 = vadd.f32 %v70, %v154
    %v156 = vpop.f32.mrb[0].mxu0
    %v157 = vpop.f32.mrb[0].mxu0
    %v158 = vpop.f32.mrb[0].mxu0
    %159 = vdwg.mxu0
    %vm160 = vcmp.gt.f32.partialorder %v155, 0.0
    %v161 = vstv %s46
    %v162 = vmul.f32 %v161, %v155
    %v163 = vsel %vm160, %v155, %v162
    %s164 = scalar_lea.vmem [#allocation6], 64
    %v165 = vld [vmem:[%s164] sm:$0xf]
    %v166 = vld [vmem:[%s164 + $0x4] sm:$0xf]
    %v167 = vld [vmem:[%s164 + $0x8] sm:$0xf]
    %v168 = vld [vmem:[%s164 + $0xc] sm:$0xf]
    %v169 = vld [vmem:[%s164 + $0x10] sm:$0xf]
    %v170 = vld [vmem:[%s164 + $0x14] sm:$0xf]
    %v171 = vld [vmem:[%s164 + $0x18] sm:$0xf]
    %v172 = vld [vmem:[%s164 + $0x1c] sm:$0xf]
    %v173 = vld [vmem:[%s164 + $0x20] sm:$0xf]
    %v174 = vld [vmem:[%s164 + $0x24] sm:$0xf]
    %v175 = vld [vmem:[%s164 + $0x28] sm:$0xf]
    %v176 = vld [vmem:[%s164 + $0x2c] sm:$0xf]
    %v177 = vld [vmem:[%s164 + $0x30] sm:$0xf]
    %v178 = vld [vmem:[%s164 + $0x34] sm:$0xf]
    %v179 = vld [vmem:[%s164 + $0x38] sm:$0xf]
    %v180 = vld [vmem:[%s164 + $0x3c] sm:$0xf]
    %s181 = scalar_lea.vmem %s3, 1
    %v182 = vld [vmem:[%s181] sm:$0x1]
    %v183 = vpack.c.bf16 %v163, %v163
    %v185 = vlaneseq
    %v186 = vshrl.u32 %v185, 7
    %v187 = vsub.s32 0, %v186
    %v188 = vrot.slane %v182, %v187
    %v206 = vunpack.c.l.b16 %v165
    %v207 = vunpack.c.l.b16 %v166
    %v208 = vunpack.c.l.b16 %v167
    %v209 = vunpack.c.l.b16 %v168
    %v210 = vunpack.c.l.b16 %v169
    %v211 = vunpack.c.l.b16 %v170
    %v212 = vunpack.c.l.b16 %v171
    %v213 = vunpack.c.l.b16 %v172
    %v214 = vunpack.c.l.b16 %v173
    %v215 = vunpack.c.l.b16 %v174
    %v216 = vunpack.c.l.b16 %v175
    %v217 = vunpack.c.l.b16 %v176
    %v218 = vunpack.c.l.b16 %v177
    %v219 = vunpack.c.l.b16 %v178
    %v220 = vunpack.c.l.b16 %v179
    %v221 = vunpack.c.l.b16 %v180
    %v222 = vpack.c.b16 %v207, %v206
    %v223 = vpack.c.b16 %v209, %v208
    %v224 = vpack.c.b16 %v211, %v210
    %v225 = vpack.c.b16 %v213, %v212
    %v226 = vpack.c.b16 %v215, %v214
    %v227 = vpack.c.b16 %v217, %v216
    %v228 = vpack.c.b16 %v219, %v218
    %v229 = vpack.c.b16 %v221, %v220
    %238 = vmatprep.subr.bf16.mxu0 0
    %239 = vmatpush1.bf16.msra.mxu0 %v222
    %240 = vmatprep.subr.bf16.mxu0 0
    %241 = vmatpush1.bf16.msra.mxu0 %v223
    %242 = vmatprep.subr.bf16.mxu0 0
    %243 = vmatpush1.bf16.msra.mxu0 %v224
    %244 = vmatprep.subr.bf16.mxu0 0
    %245 = vmatpush1.bf16.msra.mxu0 %v225
    %246 = vmatprep.subr.bf16.mxu0 0
    %247 = vmatpush1.bf16.msra.mxu0 %v226
    %248 = vmatprep.subr.bf16.mxu0 0
    %249 = vmatpush1.bf16.msra.mxu0 %v227
    %250 = vmatprep.subr.bf16.mxu0 0
    %251 = vmatpush1.bf16.msra.mxu0 %v228
    %252 = vmatprep.subr.bf16.mxu0 0
    %253 = vmatpush1.bf16.msra.mxu0 %v229
    %254 = vmatprep.subr.bf16.mxu0 0
    %255 = vmatpush1.bf16.msra.mxu0 0
    %256 = vmatprep.subr.bf16.mxu0 0
    %257 = vmatpush1.bf16.msra.mxu0 0
    %258 = vmatprep.subr.bf16.mxu0 0
    %259 = vmatpush1.bf16.msra.mxu0 0
    %260 = vmatprep.subr.bf16.mxu0 0
    %261 = vmatpush1.bf16.msra.mxu0 0
    %262 = vmatprep.subr.bf16.mxu0 0
    %263 = vmatpush1.bf16.msra.mxu0 0
    %264 = vmatprep.subr.bf16.mxu0 0
    %265 = vmatpush1.bf16.msra.mxu0 0
    %266 = vmatprep.subr.bf16.mxu0 0
    %267 = vmatpush1.bf16.msra.mxu0 0
    %268 = vmatprep.subr.bf16.mxu0 0
    %269 = vmatpush1.bf16.msra.mxu0 0
    %270 = vmatprep.mubr.bf16.mxu0 0
    %271 = vmatmul.mubr.bf16.gmra.mrb[0].mxu0 %v183
    %v272 = vpop.f32.mrb[0].mxu0
    %v273 = vadd.f32 %v188, %v272
    %v274 = vpop.f32.mrb[0].mxu0
    %v275 = vpop.f32.mrb[0].mxu0
    %v276 = vpop.f32.mrb[0].mxu0
    %277 = vdwg.mxu0
    %vm278 = vcmp.gt.f32.partialorder %v273, 0.0
    %v279 = vmul.f32 %v161, %v273
    %v280 = vsel %vm278, %v273, %v279
    %s281 = scalar_lea.vmem [#allocation6], 128
    %v282 = vld [vmem:[%s281] sm:$0xf]
    %v283 = vld [vmem:[%s281 + $0x4] sm:$0xf]
    %v284 = vld [vmem:[%s281 + $0x8] sm:$0xf]
    %v285 = vld [vmem:[%s281 + $0xc] sm:$0xf]
    %v286 = vld [vmem:[%s281 + $0x10] sm:$0xf]
    %v287 = vld [vmem:[%s281 + $0x14] sm:$0xf]
    %v288 = vld [vmem:[%s281 + $0x18] sm:$0xf]
    %v289 = vld [vmem:[%s281 + $0x1c] sm:$0xf]
    %v290 = vld [vmem:[%s281 + $0x20] sm:$0xf]
    %v291 = vld [vmem:[%s281 + $0x24] sm:$0xf]
    %v292 = vld [vmem:[%s281 + $0x28] sm:$0xf]
    %v293 = vld [vmem:[%s281 + $0x2c] sm:$0xf]
    %v294 = vld [vmem:[%s281 + $0x30] sm:$0xf]
    %v295 = vld [vmem:[%s281 + $0x34] sm:$0xf]
    %v296 = vld [vmem:[%s281 + $0x38] sm:$0xf]
    %v297 = vld [vmem:[%s281 + $0x3c] sm:$0xf]
    %s298 = scalar_lea.vmem %s3, 2
    %v299 = vld [vmem:[%s298] sm:$0x1]
    %v300 = vpack.c.bf16 %v280, %v280
    %v302 = vlaneseq
    %v303 = vshrl.u32 %v302, 7
    %v304 = vsub.s32 0, %v303
    %v305 = vrot.slane %v299, %v304
    %v323 = vunpack.c.l.b16 %v282
    %v324 = vunpack.c.l.b16 %v283
    %v325 = vunpack.c.l.b16 %v284
    %v326 = vunpack.c.l.b16 %v285
    %v327 = vunpack.c.l.b16 %v286
    %v328 = vunpack.c.l.b16 %v287
    %v329 = vunpack.c.l.b16 %v288
    %v330 = vunpack.c.l.b16 %v289
    %v331 = vunpack.c.l.b16 %v290
    %v332 = vunpack.c.l.b16 %v291
    %v333 = vunpack.c.l.b16 %v292
    %v334 = vunpack.c.l.b16 %v293
    %v335 = vunpack.c.l.b16 %v294
    %v336 = vunpack.c.l.b16 %v295
    %v337 = vunpack.c.l.b16 %v296
    %v338 = vunpack.c.l.b16 %v297
    %v339 = vpack.c.b16 %v324, %v323
    %v340 = vpack.c.b16 %v326, %v325
    %v341 = vpack.c.b16 %v328, %v327
    %v342 = vpack.c.b16 %v330, %v329
    %v343 = vpack.c.b16 %v332, %v331
    %v344 = vpack.c.b16 %v334, %v333
    %v345 = vpack.c.b16 %v336, %v335
    %v346 = vpack.c.b16 %v338, %v337
    %355 = vmatprep.subr.bf16.mxu0 0
    %356 = vmatpush1.bf16.msra.mxu0 %v339
    %357 = vmatprep.subr.bf16.mxu0 0
    %358 = vmatpush1.bf16.msra.mxu0 %v340
    %359 = vmatprep.subr.bf16.mxu0 0
    %360 = vmatpush1.bf16.msra.mxu0 %v341
    %361 = vmatprep.subr.bf16.mxu0 0
    %362 = vmatpush1.bf16.msra.mxu0 %v342
    %363 = vmatprep.subr.bf16.mxu0 0
    %364 = vmatpush1.bf16.msra.mxu0 %v343
    %365 = vmatprep.subr.bf16.mxu0 0
    %366 = vmatpush1.bf16.msra.mxu0 %v344
    %367 = vmatprep.subr.bf16.mxu0 0
    %368 = vmatpush1.bf16.msra.mxu0 %v345
    %369 = vmatprep.subr.bf16.mxu0 0
    %370 = vmatpush1.bf16.msra.mxu0 %v346
    %371 = vmatprep.subr.bf16.mxu0 0
    %372 = vmatpush1.bf16.msra.mxu0 0
    %373 = vmatprep.subr.bf16.mxu0 0
    %374 = vmatpush1.bf16.msra.mxu0 0
    %375 = vmatprep.subr.bf16.mxu0 0
    %376 = vmatpush1.bf16.msra.mxu0 0
    %377 = vmatprep.subr.bf16.mxu0 0
    %378 = vmatpush1.bf16.msra.mxu0 0
    %379 = vmatprep.subr.bf16.mxu0 0
    %380 = vmatpush1.bf16.msra.mxu0 0
    %381 = vmatprep.subr.bf16.mxu0 0
    %382 = vmatpush1.bf16.msra.mxu0 0
    %383 = vmatprep.subr.bf16.mxu0 0
    %384 = vmatpush1.bf16.msra.mxu0 0
    %385 = vmatprep.subr.bf16.mxu0 0
    %386 = vmatpush1.bf16.msra.mxu0 0
    %387 = vmatprep.mubr.bf16.mxu0 0
    %388 = vmatmul.mubr.bf16.gmra.mrb[0].mxu0 %v300
    %v389 = vpop.f32.mrb[0].mxu0
    %v390 = vadd.f32 %v305, %v389
    %v391 = vpop.f32.mrb[0].mxu0
    %v392 = vpop.f32.mrb[0].mxu0
    %v393 = vpop.f32.mrb[0].mxu0
    %394 = vdwg.mxu0
    %395 = vst [vmem:[#allocation8] sm:$0xff] %v390
    // Predicated region
    $region26: #{fused_mlp_forward.1} parent=1 // pred_check
      _
    $region27: #{fused_mlp_forward.1} parent=1 // pred_check_branch
      %397 = sbr.rel (0) target = $region29
    $region28: #{fused_mlp_forward.1} parent=1 // pred_region
      %s399 = ssub.s32 128, 128
      %400 = vsyncadd [#allocation5], %s399
      %s402 = sshll.u32 [#allocation8], 4
      %s403 = int_to_ptr.vmem [resolvable:$true] %s402
      %405 = dma.vmem_to_hbm [thread:$0]  %s403, 128, %s4, [#allocation5]
    $region29: #{fused_mlp_forward.1} parent=1 // pred_fallthru
      _
    // Predicated region
    $region30: #{fused_mlp_forward.1} parent=1 // pred_check
      _
    $region31: #{fused_mlp_forward.1} parent=1 // pred_check_branch
      %407 = sbr.rel (0) target = $region33
    $region32: #{fused_mlp_forward.1} parent=1 // pred_region
      %408 = dma.done [#allocation5], 128
    $region33: #{fused_mlp_forward.1} parent=1 // pred_fallthru
      _
    %409 = vsyncpa [#allocation4], 1
    %410 = vsyncpa [#allocation7], 1
    %411 = vsyncpa [#allocation5], 1

</llo_original>
